<compile_context>
chip_gen: v6e
topology: v6e:2x2x1
jax: 0.10.0
libtpu: 0.0.40
codegen_flags: <defaults>
</compile_context>

<pallas_src>
import functools

import jax
import jax.numpy as jnp
from jax import lax
from jax.experimental import pallas as pl
from jax.experimental.pallas import tpu as pltpu

MSE_WEIGHT = 0.7
SAFETY_WEIGHT = 0.2
SMOOTHNESS_WEIGHT = 0.1
_NEG_WEIGHT = SAFETY_WEIGHT + SMOOTHNESS_WEIGHT  # coefficient of relu(-p), folded at trace time

_LANES = 128
_SMALL_BLOCK_ROWS = 2048   # <= 1 MiB/input: single full-array block, single grid step
_GRID_BLOCK_ROWS = 8192    # 4 MiB/input/block; 16 MiB double-buffered (2 inputs)
_VMEM_LIMIT_BYTES = 32 * 1024 * 1024  # <= scoped default on v7x, raises v5e's 16 MiB default


def _weighted_elementwise(p, t):
    """w1*(p-t)^2 + w2*relu(p-1) + w3*relu(p) + (w2+w3)*relu(-p), in f32.

    Exactly equal to w1*(p-t)^2 + w2*(relu(p-1)+relu(-p)) + w3*|p|.
    """
    p = p.astype(jnp.float32)
    t = t.astype(jnp.float32)
    diff = p - t
    return (MSE_WEIGHT * (diff * diff)
            + SAFETY_WEIGHT * jnp.maximum(p - 1.0, 0.0)
            + SMOOTHNESS_WEIGHT * jnp.maximum(p, 0.0)
            + _NEG_WEIGHT * jnp.maximum(-p, 0.0))


def _loss_single_block_kernel(p_ref, t_ref, out_ref, *, inv_n):
    # Small-input fast path: one grid step, no accumulator, no phase branches.
    w = _weighted_elementwise(p_ref[...], t_ref[...])
    out_ref[0] = jnp.sum(w) * inv_n


def _loss_grid_kernel(p_ref, t_ref, out_ref, acc_ref, *,
                      inv_n, total_rows, block_rows, need_mask):
    i = pl.program_id(0)
    last = pl.num_programs(0) - 1

    @pl.when(i == 0)
    def _():
        acc_ref[...] = jnp.zeros_like(acc_ref)

    w = _weighted_elementwise(p_ref[...], t_ref[...])

    def _accumulate(wv):
        # Leading-axis partial sum into a tiny (8, 128) f32 accumulator:
        # pure per-vreg VPU adds (no cross-lane movement, no block-sized RMW).
        acc_ref[...] += jnp.sum(wv.reshape(-1, 8, _LANES), axis=0)

    if need_mask:
        # Only the final block can be ragged: keep the iota/compare/select off
        # the hot path of every other grid step.
        @pl.when(i != last)
        def _():
            _accumulate(w)

        @pl.when(i == last)
        def _():
            row_ids = i * block_rows + lax.broadcasted_iota(jnp.int32, w.shape, 0)
            _accumulate(jnp.where(row_ids < total_rows, w, 0.0))
    else:
        _accumulate(w)

    @pl.when(i == last)
    def _():
        # Pay the cross-lane reduce exactly once, on an (8, 128) tile.
        out_ref[0] = jnp.sum(acc_ref[...]) * inv_n


def advanced_loss(predictions, targets):
    """Pallas TPU implementation of AdvancedLoss.forward (returns scalar f32)."""
    assert predictions.shape == targets.shape
    n_elements = int(predictions.size)
    inv_n = 1.0 / float(n_elements)

    p_flat = predictions.reshape(-1)
    t_flat = targets.reshape(-1)

    # Pad to a multiple of 128 lanes only when necessary (not hit by the demo
    # shape).  Zero padding contributes zero to every term and the divide uses
    # the true element count, so the result stays exact.
    pad = (-n_elements) % _LANES
    if pad:
        p_flat = jnp.pad(p_flat, (0, pad))
        t_flat = jnp.pad(t_flat, (0, pad))

    rows = p_flat.size // _LANES
    p2d = p_flat.reshape(rows, _LANES)
    t2d = t_flat.reshape(rows, _LANES)

    if rows <= _SMALL_BLOCK_ROWS:
        # Genuinely small input: a single full-array block, single grid step.
        block_rows = rows
        grid = 1
        kernel = functools.partial(_loss_single_block_kernel, inv_n=inv_n)
        scratch_shapes = []
    else:
        # Pipelined streaming path with large, (8,128)-aligned blocks.
        block_rows = min(_GRID_BLOCK_ROWS, (rows // 8) * 8)
        grid = pl.cdiv(rows, block_rows)
        kernel = functools.partial(
            _loss_grid_kernel,
            inv_n=inv_n,
            total_rows=rows,
            block_rows=block_rows,
            need_mask=(rows % block_rows != 0),
        )
        scratch_shapes = [pltpu.VMEM((8, _LANES), jnp.float32)]

    out = pl.pallas_call(
        kernel,
        out_shape=jax.ShapeDtypeStruct((1,), jnp.float32),
        grid_spec=pltpu.PrefetchScalarGridSpec(
            num_scalar_prefetch=0,
            grid=(grid,),
            in_specs=[
                pl.BlockSpec((block_rows, _LANES), lambda i: (i, 0)),
                pl.BlockSpec((block_rows, _LANES), lambda i: (i, 0)),
            ],
            out_specs=pl.BlockSpec(memory_space=pltpu.MemorySpace.SMEM),
            scratch_shapes=scratch_shapes,
        ),
        compiler_params=pltpu.CompilerParams(
            dimension_semantics=("arbitrary",),
            vmem_limit_bytes=_VMEM_LIMIT_BYTES),
    )(p2d, t2d)
    return out[0]


def _reference_loss(predictions, targets):
    p = predictions.astype(jnp.float32)
    t = targets.astype(jnp.float32)
    mse_loss = jnp.mean((p - t) ** 2)
    extreme_penalty = jnp.mean(jnp.maximum(p - 1.0, 0.0) + jnp.maximum(-p, 0.0))
    smoothness_penalty = jnp.mean(jnp.abs(p))
    return (MSE_WEIGHT * mse_loss
            + SAFETY_WEIGHT * extreme_penalty
            + SMOOTHNESS_WEIGHT * smoothness_penalty)


if __name__ == "__main__":
    key = jax.random.PRNGKey(0)
    kp, kt = jax.random.split(key)

    # Small NCHW shapes consistent with a conv-model's output/target pair
    # (single-block fast path).
    predictions = jax.random.normal(kp, (2, 4, 16, 16), dtype=jnp.float32)
    targets = jax.random.normal(kt, (2, 4, 16, 16), dtype=jnp.float32)
    loss = advanced_loss(predictions, targets)
    jax.block_until_ready(loss)
    ref = _reference_loss(predictions, targets)
    assert jnp.allclose(loss, ref, rtol=1e-5, atol=1e-5), (loss, ref)

    # Also exercise the pipelined grid path (2 steps, ragged + masked last block).
    kp2, kt2 = jax.random.split(jax.random.PRNGKey(1))
    p_big = jax.random.normal(kp2, (8, 16, 100, 128), dtype=jnp.float32)  # 12800 rows
    t_big = jax.random.normal(kt2, (8, 16, 100, 128), dtype=jnp.float32)
    loss_big = advanced_loss(p_big, t_big)
    jax.block_until_ready(loss_big)
    ref_big = _reference_loss(p_big, t_big)
    assert jnp.allclose(loss_big, ref_big, rtol=1e-5, atol=1e-5), (loss_big, ref_big)

    print("KERNEL_OK")
</pallas_src>

<mosaic_0001>
module attributes {stable_mosaic.version = 11 : i64} {
  func.func @_loss_single_block_kernel(%arg0: i32, %arg1: memref<16x128xf32, #tpu.memory_space<vmem>>, %arg2: memref<16x128xf32, #tpu.memory_space<vmem>>, %arg3: memref<1xf32, #tpu.memory_space<smem>>) attributes {dimension_semantics = [#tpu.dimension_semantics<arbitrary>], iteration_bounds = array<i64: 1>, scalar_prefetch = 0 : i64, scratch_operands = 0 : i64, tpu.core_type = #tpu.core_type<tc>, window_params = [{transform_indices = @transform_0, window_bounds = array<i64: 16, 128>}, {transform_indices = @transform_1, window_bounds = array<i64: 16, 128>}, {transform_indices = @transform_2, window_bounds = array<i64: 1>}]} {
    %c0 = arith.constant 0 : index
    %c0_0 = arith.constant 0 : index
    %0 = vector.load %arg1[%c0, %c0_0] : memref<16x128xf32, #tpu.memory_space<vmem>>, vector<16x128xf32>
    %c0_1 = arith.constant 0 : index
    %c0_2 = arith.constant 0 : index
    %1 = vector.load %arg2[%c0_1, %c0_2] : memref<16x128xf32, #tpu.memory_space<vmem>>, vector<16x128xf32>
    %2 = arith.subf %0, %1 : vector<16x128xf32>
    %3 = arith.mulf %2, %2 : vector<16x128xf32>
    %cst = arith.constant 0.699999988 : f32
    %4 = vector.broadcast %cst : f32 to vector<16x128xf32>
    %5 = arith.mulf %4, %3 : vector<16x128xf32>
    %cst_3 = arith.constant 1.000000e+00 : f32
    %6 = vector.broadcast %cst_3 : f32 to vector<16x128xf32>
    %7 = arith.subf %0, %6 : vector<16x128xf32>
    %cst_4 = arith.constant 0.000000e+00 : f32
    %8 = vector.broadcast %cst_4 : f32 to vector<16x128xf32>
    %9 = arith.maximumf %7, %8 : vector<16x128xf32>
    %cst_5 = arith.constant 2.000000e-01 : f32
    %10 = vector.broadcast %cst_5 : f32 to vector<16x128xf32>
    %11 = arith.mulf %10, %9 : vector<16x128xf32>
    %12 = arith.addf %5, %11 : vector<16x128xf32>
    %cst_6 = arith.constant 0.000000e+00 : f32
    %13 = vector.broadcast %cst_6 : f32 to vector<16x128xf32>
    %14 = arith.maximumf %0, %13 : vector<16x128xf32>
    %cst_7 = arith.constant 1.000000e-01 : f32
    %15 = vector.broadcast %cst_7 : f32 to vector<16x128xf32>
    %16 = arith.mulf %15, %14 : vector<16x128xf32>
    %17 = arith.addf %12, %16 : vector<16x128xf32>
    %cst_8 = arith.constant 0.000000e+00 : f32
    %18 = vector.broadcast %cst_8 : f32 to vector<16x128xf32>
    %19 = arith.subf %18, %0 : vector<16x128xf32>
    %cst_9 = arith.constant 0.000000e+00 : f32
    %20 = vector.broadcast %cst_9 : f32 to vector<16x128xf32>
    %21 = arith.maximumf %19, %20 : vector<16x128xf32>
    %cst_10 = arith.constant 3.000000e-01 : f32
    %22 = vector.broadcast %cst_10 : f32 to vector<16x128xf32>
    %23 = arith.mulf %22, %21 : vector<16x128xf32>
    %24 = arith.addf %17, %23 : vector<16x128xf32>
    %25 = vector.shape_cast %24 : vector<16x128xf32> to vector<1x16x128xf32>
    %cst_11 = arith.constant dense<0.000000e+00> : vector<1xf32>
    %26 = vector.multi_reduction <add>, %25, %cst_11 [1, 2] : vector<1x16x128xf32> to vector<1xf32>
    %27 = vector.shape_cast %26 : vector<1xf32> to vector<1x1x1xf32>
    %28 = vector.extract %27[0, 0, 0] : f32 from vector<1x1x1xf32>
    %cst_12 = arith.constant 4.8828125E-4 : f32
    %29 = arith.mulf %28, %cst_12 : f32
    %c0_13 = arith.constant 0 : index
    %30 = memref.load %arg3[%c0_13] : memref<1xf32, #tpu.memory_space<smem>>
    memref.store %29, %arg3[%c0_13] : memref<1xf32, #tpu.memory_space<smem>>
    return
  }
  func.func @transform_0(%arg0: i32) -> (i32, i32) {
    %c0_i32 = arith.constant 0 : i32
    %c0_i32_0 = arith.constant 0 : i32
    return %arg0, %c0_i32 : i32, i32
  }
  func.func @transform_1(%arg0: i32) -> (i32, i32) {
    %c0_i32 = arith.constant 0 : i32
    %c0_i32_0 = arith.constant 0 : i32
    return %arg0, %c0_i32 : i32, i32
  }
  func.func @transform_2(%arg0: i32) -> i32 {
    %c0_i32 = arith.constant 0 : i32
    %c0_i32_0 = arith.constant 0 : i32
    return %c0_i32 : i32
  }
}

</mosaic_0001>

<llo_original>
// kernel: tpu_custom_call.1
$region0: #{tpu_custom_call.1}
  #allocation0 [shape = 'u32[]', space=smem, size = 0x4, offset = 0x4, fixed_abs, tag = 'smem constant byte address 0x4 - core index']
  #allocation1 [shape = 'u32[144,128]{1,0:T(1,128)}', space=vmem, size = 0x12000, scoped, tag = 'internal scratch']
  %s0 = inlined_call_operand.hbm [shape: f32[16,128], index: 0, kind: input, shape index: {}]
  %s1 = inlined_call_operand.hbm [shape: f32[16,128], index: 1, kind: input, shape index: {}]
  %s2 = inlined_call_operand.hbm [shape: f32[1], index: 2, kind: output, shape index: {}]
  %s3 = sld [smem:[#allocation0]]
  $region26: #{tpu_custom_call.1} parent=0
    _
  %s5 = ssub.s32 1, %s3
  %s6 = scalar_select 0, %s5, %s3
  $region1: #{tpu_custom_call.1} parent=0
    #allocation2 [shape = 'u8[8192]{0}', space=vmem, size = 0x2000, scoped, tag = 'input window, operand 0, single buffered']
    #allocation3 [shape = 's32[1]{0}', space=sflag, size = 0x4, scoped, tag = 'scoped memory for tpu_custom_call.1']
    #allocation4 [shape = 's32[1]{0}', space=sflag, size = 0x4, scoped, tag = 'scoped memory for tpu_custom_call.1']
    #allocation5 [shape = 'u8[8192]{0}', space=vmem, size = 0x2000, scoped, tag = 'input window, operand 1, single buffered']
    #allocation6 [shape = 's32[1]{0}', space=sflag, size = 0x4, scoped, tag = 'scoped memory for tpu_custom_call.1']
    #allocation7 [shape = 'u8[512]{0}', space=smem, size = 0x200, scoped, tag = 'output window, operand 0, single buffered']
    %7 = vsyncpa [#allocation3], 0
    %8 = vsyncpa [#allocation6], 0
    %9 = vsyncpa [#allocation4], 0
    // Predicated region
    $region2: #{tpu_custom_call.1} parent=1 // pred_check
      _
    $region3: #{tpu_custom_call.1} parent=1 // pred_check_branch
      %11 = sbr.rel (0) target = $region5
    $region4: #{tpu_custom_call.1} parent=1 // pred_region
      %s13 = ssub.s32 256, 256
      %14 = vsyncadd [#allocation3], %s13
      %s15 = sshll.u32 [#allocation2], 4
      %s16 = int_to_ptr.vmem [resolvable:$true] %s15
      %21 = dma.hbm_to_vmem [thread:$0]  %s0, 256, %s16, [#allocation3], 128, 128, 8
    $region5: #{tpu_custom_call.1} parent=1 // pred_fallthru
      _
    // Predicated region
    $region6: #{tpu_custom_call.1} parent=1 // pred_check
      _
    $region7: #{tpu_custom_call.1} parent=1 // pred_check_branch
      %23 = sbr.rel (0) target = $region9
    $region8: #{tpu_custom_call.1} parent=1 // pred_region
      %s25 = ssub.s32 256, 256
      %26 = vsyncadd [#allocation6], %s25
      %s27 = sshll.u32 [#allocation5], 4
      %s28 = int_to_ptr.vmem [resolvable:$true] %s27
      %33 = dma.hbm_to_vmem [thread:$0]  %s1, 256, %s28, [#allocation6], 128, 128, 8
    $region9: #{tpu_custom_call.1} parent=1 // pred_fallthru
      _
    // Predicated region
    $region10: #{tpu_custom_call.1} parent=1 // pred_check
      _
    $region11: #{tpu_custom_call.1} parent=1 // pred_check_branch
      %35 = sbr.rel (0) target = $region13
    $region12: #{tpu_custom_call.1} parent=1 // pred_region
      %36 = dma.done [#allocation3], 256
    $region13: #{tpu_custom_call.1} parent=1 // pred_fallthru
      _
    // Predicated region
    $region14: #{tpu_custom_call.1} parent=1 // pred_check
      _
    $region15: #{tpu_custom_call.1} parent=1 // pred_check_branch
      %38 = sbr.rel (0) target = $region17
    $region16: #{tpu_custom_call.1} parent=1 // pred_region
      %39 = dma.done [#allocation6], 256
    $region17: #{tpu_custom_call.1} parent=1 // pred_fallthru
      _
    %v40 = vld [vmem:[#allocation2] sm:$0xff]
    %v41 = vld [vmem:[#allocation2 + $0x8] sm:$0xff]
    %v42 = vld [vmem:[#allocation5] sm:$0xff]
    %v43 = vld [vmem:[#allocation5 + $0x8] sm:$0xff]
    %v44 = vsub.f32 %v40, %v42
    %v45 = vsub.f32 %v41, %v43
    %v46 = vmul.f32 %v44, %v44
    %v47 = vmul.f32 %v45, %v45
    %v48 = vmul.f32 %v46, 0.7
    %v49 = vmul.f32 %v47, 0.7
    %v50 = vsub.f32 %v40, 1.0
    %v51 = vsub.f32 %v41, 1.0
    %v52 = vmax.f32 %v50, 0.0
    %v53 = vmax.f32 %v51, 0.0
    %v54 = vmul.f32 %v52, 0.2
    %v55 = vmul.f32 %v53, 0.2
    %v56 = vadd.f32 %v48, %v54
    %v57 = vadd.f32 %v49, %v55
    %v58 = vmax.f32 %v40, 0.0
    %v59 = vmax.f32 %v41, 0.0
    %v60 = vmul.f32 %v58, 0.1
    %v61 = vmul.f32 %v59, 0.1
    %v62 = vadd.f32 %v56, %v60
    %v63 = vadd.f32 %v57, %v61
    %v64 = vsub.f32 0.0, %v40
    %v65 = vsub.f32 0.0, %v41
    %v66 = vmax.f32 %v64, 0.0
    %v67 = vmax.f32 %v65, 0.0
    %v68 = vmul.f32 %v66, 0.3
    %v69 = vmul.f32 %v67, 0.3
    %v70 = vadd.f32 %v62, %v68
    %v71 = vadd.f32 %v63, %v69
    %v72 = vadd.f32 %v70, %v71
    %73 = vadd.xlane.f32.xlu0 %v72
    %v74 = vpop.xlane.xlu0 %73
    %v75 = vrot.slane %v74, 4
    %v76 = vadd.f32 %v74, %v75
    %v77 = vrot.slane %v76, 2
    %v78 = vadd.f32 %v76, %v77
    %v79 = vrot.slane %v78, 1
    %v80 = vadd.f32 %v78, %v79
    %s81 = vtos %v80
    %s82 = smul.f32 %s81, 0.00048828125
    %s83 = scalar_lea.smem [#allocation7], 0
    %84 = sst [smem:[%s83]] %s82
    // Predicated region
    $region18: #{tpu_custom_call.1} parent=1 // pred_check
      _
    $region19: #{tpu_custom_call.1} parent=1 // pred_check_branch
      %86 = sbr.rel (0) target = $region21
    $region20: #{tpu_custom_call.1} parent=1 // pred_region
      %s88 = ssub.s32 16, 16
      %89 = vsyncadd [#allocation4], %s88
      %92 = dma.smem_to_hbm [#allocation7], 16, %s2, [#allocation4]
    $region21: #{tpu_custom_call.1} parent=1 // pred_fallthru
      _
    // Predicated region
    $region22: #{tpu_custom_call.1} parent=1 // pred_check
      _
    $region23: #{tpu_custom_call.1} parent=1 // pred_check_branch
      %94 = sbr.rel (0) target = $region25
    $region24: #{tpu_custom_call.1} parent=1 // pred_region
      %95 = dma.done [#allocation4], 16
    $region25: #{tpu_custom_call.1} parent=1 // pred_fallthru
      _
    %96 = sfence
    %97 = vsyncpa [#allocation3], 1
    %98 = vsyncpa [#allocation6], 1
    %99 = vsyncpa [#allocation4], 1

</llo_original>
